<compile_context>
chip_gen: v6e
topology: v6e:2x2x1
jax: 0.10.0
libtpu: 0.0.40
codegen_flags: <defaults>
</compile_context>

<pallas_src>
import functools

import jax
import jax.numpy as jnp
from jax.experimental import pallas as pl
from jax.experimental.pallas import tpu as pltpu


def _round_up(x, m):
    return (x + m - 1) // m * m


def _vmem_budget_bytes(headroom_bytes=16 * 2**20):
    """Physical VMEM capacity minus headroom; conservative fallback if unknown."""
    try:
        info = pltpu.get_tpu_info()
        cap = int(getattr(info, "vmem_capacity_bytes", 0) or 0)
        if cap > 0:
            return max(32 * 2**20, cap - headroom_bytes)
    except Exception:
        pass
    return 48 * 2**20  # v7x-safe default (64 MiB physical per TensorCore)


def _pick_hidden_tile(hidden, desired):
    """Hidden tile: full hidden if small, else a multiple of 128.

    hidden is later zero-padded up to a multiple of the tile (exact for SwiGLU).
    """
    th = max(128, (desired // 128) * 128)
    if hidden <= th:
        return hidden
    return th


def _vmem_estimate(tm, dim, th, bpe, xbpe, obpe):
    """VMEM footprint: x/out blocks resident along hidden axis (count once)."""
    return (tm * dim * xbpe              # x tile (resident)
            + tm * dim * obpe            # out tile (resident)
            + tm * dim * 4               # f32 accumulator scratch
            + 2 * dim * (2 * th) * bpe   # fused [w1|w3] tiles (double-buffered)
            + 2 * th * dim * bpe         # w2 tiles (double-buffered)
            + 3 * tm * th * 4)           # h1 / h3 / gated f32 intermediates


def _pick_row_tile(M, dim, th, bpe, xbpe, obpe, budget):
    """Largest row tile (multiple of 16) that fits the VMEM budget."""
    m_cap = _round_up(max(M, 16), 16)
    for tm in (1024, 768, 512, 384, 256, 192, 128, 96, 64, 48, 32, 16):
        if tm > m_cap:
            continue
        if _vmem_estimate(tm, dim, th, bpe, xbpe, obpe) <= 0.8 * budget:
            return tm
    return 16


def prepare_ffn_weights(w1_t, w3_t, w2_t, *, th=512, compute_dtype=jnp.bfloat16):
    """One-time weight prep: pad hidden, fuse w1|w3 per hidden tile, cast.

    w1_t, w3_t: (dim, hidden)   (nn.Linear weight transposed)
    w2_t:       (hidden, dim)
    Returns (w13, w2p, th_eff):
      w13: (dim, n_h * 2 * th_eff) with tile h = [w1 tile h | w3 tile h]
      w2p: (hidden_pad, dim)
    """
    dim, hidden = w1_t.shape
    th_eff = _pick_hidden_tile(hidden, th)
    hidden_pad = _round_up(hidden, th_eff)
    n_h = hidden_pad // th_eff
    pad_h = hidden_pad - hidden

    # Zero padding is exact for SwiGLU: padded w1/w3 cols -> gated == 0,
    # padded w2 rows are zero -> zero contribution to the down-projection.
    w1p = jnp.pad(w1_t, ((0, 0), (0, pad_h))).astype(compute_dtype)
    w3p = jnp.pad(w3_t, ((0, 0), (0, pad_h))).astype(compute_dtype)
    w2p = jnp.pad(w2_t, ((0, pad_h), (0, 0))).astype(compute_dtype)

    # Interleave per-tile so a (dim, 2*th_eff) block h holds [w1_h | w3_h].
    w13 = jnp.stack([w1p.reshape(dim, n_h, th_eff),
                     w3p.reshape(dim, n_h, th_eff)], axis=2)
    w13 = w13.reshape(dim, n_h * 2 * th_eff)
    return w13, w2p, th_eff


def _ffn_kernel(x_ref, w13_ref, w2_ref, o_ref, acc_ref):
    """One (row-tile, hidden-tile) step of the fused SwiGLU FFN.

    x_ref  : (tm, dim)      input rows (resident across the hidden axis)
    w13_ref: (dim, 2*th)    fused [w1 | w3] slice for this hidden tile
    w2_ref : (th, dim)      w2 slice for this hidden tile
    o_ref  : (tm, dim)      output tile
    acc_ref: (tm, dim) f32  accumulator scratch
    """
    h = pl.program_id(1)

    @pl.when(h == 0)
    def _():
        acc_ref[...] = jnp.zeros_like(acc_ref)

    th = w13_ref.shape[1] // 2
    # Cast x in-kernel (avoids a wrapper-side full-array HBM pass per call).
    x = x_ref[...].astype(w13_ref.dtype)

    # Fused up-projection: one MXU matmul covers both w1 and w3.
    h13 = jnp.dot(x, w13_ref[...], preferred_element_type=jnp.float32)
    h1 = h13[:, :th]
    h3 = h13[:, th:]
    # SiLU gate in f32 (sigmoid on the EUP), cast once for the down-proj.
    gated = ((h1 * jax.nn.sigmoid(h1)) * h3).astype(w2_ref.dtype)

    # Partial down-projection for this hidden slice; accumulate in f32.
    acc_ref[...] += jnp.dot(gated, w2_ref[...],
                            preferred_element_type=jnp.float32)

    @pl.when(h == pl.num_programs(1) - 1)
    def _():
        o_ref[...] = acc_ref[...].astype(o_ref.dtype)


@functools.partial(jax.jit, static_argnames=("tm_eff", "th_eff", "vmem_limit"))
def _feed_forward_impl(x2d, w13, w2p, *, tm_eff, th_eff, vmem_limit):
    m_pad, dim = x2d.shape
    hidden_pad = w2p.shape[0]
    out_dtype = x2d.dtype
    bpe = jnp.dtype(w13.dtype).itemsize
    xbpe = jnp.dtype(x2d.dtype).itemsize
    obpe = jnp.dtype(out_dtype).itemsize

    grid = (m_pad // tm_eff, hidden_pad // th_eff)

    cost = pl.CostEstimate(
        flops=6 * m_pad * dim * hidden_pad,          # 2 up-proj + 1 down-proj
        transcendentals=m_pad * hidden_pad,          # sigmoid
        # Weights are re-streamed once per row tile; x read + out written once.
        bytes_accessed=(grid[0] * 3 * dim * hidden_pad * bpe
                        + m_pad * dim * (xbpe + obpe)))

    return pl.pallas_call(
        _ffn_kernel,
        out_shape=jax.ShapeDtypeStruct((m_pad, dim), out_dtype),
        grid_spec=pltpu.PrefetchScalarGridSpec(
            num_scalar_prefetch=0,
            grid=grid,
            in_specs=[
                pl.BlockSpec((tm_eff, dim), lambda i, h: (i, 0)),      # x rows
                pl.BlockSpec((dim, 2 * th_eff), lambda i, h: (0, h)),  # [w1|w3]
                pl.BlockSpec((th_eff, dim), lambda i, h: (h, 0)),      # w2
            ],
            out_specs=pl.BlockSpec((tm_eff, dim), lambda i, h: (i, 0)),
            scratch_shapes=[pltpu.VMEM((tm_eff, dim), jnp.float32)],
        ),
        compiler_params=pltpu.CompilerParams(
            dimension_semantics=("parallel", "arbitrary"),
            vmem_limit_bytes=vmem_limit),
        cost_estimate=cost,
    )(x2d, w13, w2p)


def feed_forward(x, w13, w2p, *, th_eff, tm=None):
    """x: (..., dim).  w13 / w2p / th_eff come from prepare_ffn_weights."""
    *lead, dim = x.shape
    M = 1
    for d in lead:
        M *= d
    x2d = x.reshape(M, dim)

    bpe = jnp.dtype(w13.dtype).itemsize
    xbpe = jnp.dtype(x.dtype).itemsize
    obpe = xbpe  # output keeps x's dtype

    budget = _vmem_budget_bytes()
    if tm is None:
        tm = _pick_row_tile(M, dim, th_eff, bpe, xbpe, obpe, budget)
    tm_eff = max(16, (min(tm, _round_up(M, 16)) // 16) * 16)
    m_pad = _round_up(M, tm_eff)
    if m_pad != M:
        x2d = jnp.pad(x2d, ((0, m_pad - M), (0, 0)))

    est = _vmem_estimate(tm_eff, dim, th_eff, bpe, xbpe, obpe)
    vmem_limit = int(min(budget, max(32 * 2**20, 2 * est)))

    out2d = _feed_forward_impl(x2d, w13, w2p,
                               tm_eff=tm_eff, th_eff=th_eff,
                               vmem_limit=vmem_limit)
    if m_pad != M:
        out2d = out2d[:M]
    return out2d.reshape(*lead, dim)


if __name__ == "__main__":
    # Module config (matches FeedForward.__init__ with hidden_dim=None):
    dim = 32
    multiple_of = 32
    hidden_dim = 4 * dim
    hidden_dim = int(2 * hidden_dim / 3)
    hidden_dim = multiple_of * ((hidden_dim + multiple_of - 1) // multiple_of)  # -> 96
    dropout_p = 0.0  # inference: dropout is identity

    B, S = 2, 8

    key = jax.random.PRNGKey(0)
    kx, k1, k2, k3 = jax.random.split(key, 4)

    x = jax.random.normal(kx, (B, S, dim), dtype=jnp.float32)

    # nn.Linear(dim, hidden) stores weight as (hidden, dim); y = x @ W.T.
    w1 = jax.random.normal(k1, (hidden_dim, dim), dtype=jnp.float32) / dim ** 0.5
    w3 = jax.random.normal(k3, (hidden_dim, dim), dtype=jnp.float32) / dim ** 0.5
    w2 = jax.random.normal(k2, (dim, hidden_dim), dtype=jnp.float32) / hidden_dim ** 0.5

    # One-time weight prep (pad + fuse + bf16 cast), outside the hot path.
    w13, w2p, th_eff = prepare_ffn_weights(w1.T, w3.T, w2.T)

    out = feed_forward(x, w13, w2p, th_eff=th_eff)
    out = jax.block_until_ready(out)

    # Reference in f32 using the same bf16-rounded operands the kernel sees.
    def _bf(a):
        return a.astype(jnp.bfloat16).astype(jnp.float32)

    xr = _bf(x.reshape(-1, dim))
    h1 = xr @ _bf(w1.T)
    h3 = xr @ _bf(w3.T)
    gated = _bf((h1 * jax.nn.sigmoid(h1)) * h3)
    ref = (gated @ _bf(w2.T)).reshape(B, S, dim)

    assert out.shape == (B, S, dim)
    assert out.dtype == x.dtype
    assert jnp.allclose(out, ref, atol=3e-2, rtol=3e-2), "mismatch vs reference"

    print("KERNEL_OK")
</pallas_src>

<mosaic_0001>
module attributes {stable_mosaic.version = 11 : i64} {
  func.func @_ffn_kernel(%arg0: i32, %arg1: i32, %arg2: memref<16x32xf32, #tpu.memory_space<vmem>>, %arg3: memref<32x192xbf16, #tpu.memory_space<vmem>>, %arg4: memref<96x32xbf16, #tpu.memory_space<vmem>>, %arg5: memref<16x32xf32, #tpu.memory_space<vmem>>, %arg6: memref<16x32xf32, #tpu.memory_space<vmem>>) attributes {dimension_semantics = [#tpu.dimension_semantics<parallel>, #tpu.dimension_semantics<arbitrary>], iteration_bounds = array<i64: 1, 1>, scalar_prefetch = 0 : i64, scratch_operands = 1 : i64, tpu.core_type = #tpu.core_type<tc>, window_params = [{transform_indices = @transform_0, window_bounds = array<i64: 16, 32>}, {transform_indices = @transform_1, window_bounds = array<i64: 32, 192>}, {transform_indices = @transform_2, window_bounds = array<i64: 96, 32>}, {transform_indices = @transform_3, window_bounds = array<i64: 16, 32>}]} {
    %c0_i32 = arith.constant 0 : i32
    %0 = arith.cmpi eq, %arg1, %c0_i32 : i32
    %1 = arith.extui %0 : i1 to i32
    %c0_i32_0 = arith.constant 0 : i32
    %2 = arith.cmpi ne, %1, %c0_i32_0 : i32
    scf.if %2 {
      %cst_14 = arith.constant 0.000000e+00 : f32
      %25 = vector.broadcast %cst_14 : f32 to vector<16x32xf32>
      %c0_15 = arith.constant 0 : index
      %c0_16 = arith.constant 0 : index
      %26 = vector.load %arg6[%c0_15, %c0_16] : memref<16x32xf32, #tpu.memory_space<vmem>>, vector<16x32xf32>
      tpu.vector_store %arg6[%c0_15, %c0_16], %25 {strides = array<i32>} : memref<16x32xf32, #tpu.memory_space<vmem>>, vector<16x32xf32>,
    } else {
    }
    %c0 = arith.constant 0 : index
    %c0_1 = arith.constant 0 : index
    %3 = vector.load %arg2[%c0, %c0_1] : memref<16x32xf32, #tpu.memory_space<vmem>>, vector<16x32xf32>
    %4 = arith.truncf %3 : vector<16x32xf32> to vector<16x32xbf16>
    %c0_2 = arith.constant 0 : index
    %c0_3 = arith.constant 0 : index
    %5 = vector.load %arg3[%c0_2, %c0_3] : memref<32x192xbf16, #tpu.memory_space<vmem>>, vector<32x192xbf16>
    %cst = arith.constant dense<0.000000e+00> : vector<16x192xf32>
    %6 = tpu.matmul %4, %5, %cst {dimension_numbers = #tpu.dot_dimension_numbers<[1], [0], [0], [1], [0, 0, 1, 1], [], []>} : vector<16x32xbf16>, vector<32x192xbf16>, vector<16x192xf32> -> vector<16x192xf32>
    %7 = vector.extract_strided_slice %6 {offsets = [0, 0], sizes = [16, 96], strides = [1, 1]} : vector<16x192xf32> to vector<16x96xf32>
    %8 = vector.extract_strided_slice %6 {offsets = [0, 96], sizes = [16, 96], strides = [1, 1]} : vector<16x192xf32> to vector<16x96xf32>
    %9 = arith.negf %7 : vector<16x96xf32>
    %10 = math.exp %9 : vector<16x96xf32>
    %cst_4 = arith.constant 1.000000e+00 : f32
    %11 = vector.broadcast %cst_4 : f32 to vector<16x96xf32>
    %12 = arith.addf %11, %10 : vector<16x96xf32>
    %13 = arith.divf %11, %12 : vector<16x96xf32>
    %14 = arith.mulf %7, %13 : vector<16x96xf32>
    %15 = arith.mulf %14, %8 : vector<16x96xf32>
    %16 = arith.truncf %15 : vector<16x96xf32> to vector<16x96xbf16>
    %c0_5 = arith.constant 0 : index
    %c0_6 = arith.constant 0 : index
    %17 = vector.load %arg6[%c0_5, %c0_6] : memref<16x32xf32, #tpu.memory_space<vmem>>, vector<16x32xf32>
    %c0_7 = arith.constant 0 : index
    %c0_8 = arith.constant 0 : index
    %18 = vector.load %arg4[%c0_7, %c0_8] : memref<96x32xbf16, #tpu.memory_space<vmem>>, vector<96x32xbf16>
    %cst_9 = arith.constant dense<0.000000e+00> : vector<16x32xf32>
    %19 = tpu.matmul %16, %18, %cst_9 {dimension_numbers = #tpu.dot_dimension_numbers<[1], [0], [0], [1], [0, 0, 1, 1], [], []>} : vector<16x96xbf16>, vector<96x32xbf16>, vector<16x32xf32> -> vector<16x32xf32>
    %20 = arith.addf %17, %19 : vector<16x32xf32>
    %c0_10 = arith.constant 0 : index
    %c0_11 = arith.constant 0 : index
    %21 = vector.load %arg6[%c0_10, %c0_11] : memref<16x32xf32, #tpu.memory_space<vmem>>, vector<16x32xf32>
    tpu.vector_store %arg6[%c0_10, %c0_11], %20 {strides = array<i32>} : memref<16x32xf32, #tpu.memory_space<vmem>>, vector<16x32xf32>,
    %c0_i32_12 = arith.constant 0 : i32
    %22 = arith.cmpi eq, %arg1, %c0_i32_12 : i32
    %23 = arith.extui %22 : i1 to i32
    %c0_i32_13 = arith.constant 0 : i32
    %24 = arith.cmpi ne, %23, %c0_i32_13 : i32
    scf.if %24 {
      %c0_14 = arith.constant 0 : index
      %c0_15 = arith.constant 0 : index
      %25 = vector.load %arg6[%c0_14, %c0_15] : memref<16x32xf32, #tpu.memory_space<vmem>>, vector<16x32xf32>
      %c0_16 = arith.constant 0 : index
      %c0_17 = arith.constant 0 : index
      %26 = vector.load %arg5[%c0_16, %c0_17] : memref<16x32xf32, #tpu.memory_space<vmem>>, vector<16x32xf32>
      tpu.vector_store %arg5[%c0_16, %c0_17], %25 {strides = array<i32>} : memref<16x32xf32, #tpu.memory_space<vmem>>, vector<16x32xf32>,
    } else {
    }
    return
  }
  func.func @transform_0(%arg0: i32, %arg1: i32) -> (i32, i32) {
    %c0_i32 = arith.constant 0 : i32
    %c0_i32_0 = arith.constant 0 : i32
    return %arg0, %c0_i32 : i32, i32
  }
  func.func @transform_1(%arg0: i32, %arg1: i32) -> (i32, i32) {
    %c0_i32 = arith.constant 0 : i32
    %c0_i32_0 = arith.constant 0 : i32
    return %c0_i32, %arg1 : i32, i32
  }
  func.func @transform_2(%arg0: i32, %arg1: i32) -> (i32, i32) {
    %c0_i32 = arith.constant 0 : i32
    %c0_i32_0 = arith.constant 0 : i32
    return %arg1, %c0_i32 : i32, i32
  }
  func.func @transform_3(%arg0: i32, %arg1: i32) -> (i32, i32) {
    %c0_i32 = arith.constant 0 : i32
    %c0_i32_0 = arith.constant 0 : i32
    return %arg0, %c0_i32 : i32, i32
  }
}

</mosaic_0001>

<llo_original>
// kernel: _feed_forward_impl.1
$region0: #{_feed_forward_impl.1}
  #allocation0 [shape = 'u32[]', space=smem, size = 0x4, offset = 0x4, fixed_abs, tag = 'smem constant byte address 0x4 - core index']
  #allocation1 [shape = 'u32[144,128]{1,0:T(1,128)}', space=vmem, size = 0x12000, scoped, tag = 'internal scratch']
  #allocation2 [shape = 'f32[16,32]{1,0:T(8,128)}', space=vmem, size = 0x2000, scoped, tag = 'scratch operand']
  %s0 = inlined_call_operand.vmem [shape: f32[16,32], index: 0, kind: input, shape index: {}]
  %s1 = inlined_call_operand.vmem [shape: bf16[32,192], index: 1, kind: input, shape index: {}]
  %s2 = inlined_call_operand.vmem [shape: bf16[96,32], index: 2, kind: input, shape index: {}]
  %s3 = inlined_call_operand.hbm [shape: f32[16,32], index: 3, kind: output, shape index: {}]
  %s4 = sld [smem:[#allocation0]]
  $region30: #{_feed_forward_impl.1} parent=0
    _
  %s6 = ssub.s32 1, %s4
  %s7 = scalar_select 0, %s6, %s4
  $region1: #{_feed_forward_impl.1} parent=0
    #allocation3 [shape = 'u8[8192]{0}', space=vmem, size = 0x2000, scoped, tag = 'output window, operand 0, single buffered']
    #allocation4 [shape = 's32[1]{0}', space=sflag, size = 0x4, scoped, tag = 'scoped memory for _feed_forward_impl.1']
    %8 = vsyncpa [#allocation4], 0
    // Predicated region
    $region2: #{_feed_forward_impl.1} parent=1 // pred_check
      _
    $region3: #{_feed_forward_impl.1} parent=1 // pred_check_branch
      %10 = sbr.rel (0) target = $region5
    $region4: #{_feed_forward_impl.1} parent=1 // pred_region
      _
    $region5: #{_feed_forward_impl.1} parent=1 // pred_fallthru
      _
    // Predicated region
    $region6: #{_feed_forward_impl.1} parent=1 // pred_check
      _
    $region7: #{_feed_forward_impl.1} parent=1 // pred_check_branch
      %12 = sbr.rel (0) target = $region9
    $region8: #{_feed_forward_impl.1} parent=1 // pred_region
      _
    $region9: #{_feed_forward_impl.1} parent=1 // pred_fallthru
      _
    // Predicated region
    $region10: #{_feed_forward_impl.1} parent=1 // pred_check
      _
    $region11: #{_feed_forward_impl.1} parent=1 // pred_check_branch
      %14 = sbr.rel (0) target = $region13
    $region12: #{_feed_forward_impl.1} parent=1 // pred_region
      _
    $region13: #{_feed_forward_impl.1} parent=1 // pred_fallthru
      _
    %p16 = scmp.eq.s32.totalorder 0, 0
    // Predicated region
    $region14: #{_feed_forward_impl.1} parent=1 // pred_check
      %p17 = pneg %p16
    $region15: #{_feed_forward_impl.1} parent=1 // pred_check_branch
      %19 = sbr.rel (%p17) target = $region17
    $region16: #{_feed_forward_impl.1} parent=1 // pred_region
      %vm20 = vcmask 261120
      %21 = vst.msk [vmem:[#allocation2] sm:$0xff] %vm20, 0.0
      %22 = vst.msk [vmem:[#allocation2 + $0x8] sm:$0xff] %vm20, 0.0
    $region17: #{_feed_forward_impl.1} parent=1 // pred_fallthru
      _
    %v23 = vld [vmem:[%s0] sm:$0xff]
    %v24 = vld [vmem:[%s0 + $0x8] sm:$0xff]
    %v25 = vpack.c.bf16 %v24, %v23
    %v26 = vld [vmem:[%s1] sm:$0xff]
    %v27 = vld [vmem:[%s1 + $0x8] sm:$0xff]
    %v28 = vld [vmem:[%s1 + $0x10] sm:$0xff]
    %v29 = vld [vmem:[%s1 + $0x18] sm:$0xff]
    %v34 = vunpack.c.l.b16 %v26
    %v35 = vunpack.c.h.b16 %v26
    %v36 = vunpack.c.l.b16 %v27
    %v37 = vunpack.c.h.b16 %v27
    %v38 = vunpack.c.l.b16 %v28
    %v39 = vunpack.c.h.b16 %v28
    %v40 = vunpack.c.l.b16 %v29
    %v41 = vunpack.c.h.b16 %v29
    %v42 = vpack.c.b16 %v36, %v34
    %v43 = vpack.c.b16 %v37, %v35
    %v44 = vpack.c.b16 %v40, %v38
    %v45 = vpack.c.b16 %v41, %v39
    %vm50 = vcmask 261120
    %v52 = vsel %vm50, %v25, 0
    %54 = vmatprep.subr.bf16.mxu0 0
    %55 = vmatpush1.bf16.msra.mxu0 0
    %56 = vmatprep.subr.bf16.mxu0 0
    %57 = vmatpush1.bf16.msra.mxu0 0
    %58 = vmatprep.subr.bf16.mxu0 0
    %59 = vmatpush1.bf16.msra.mxu0 0
    %60 = vmatprep.subr.bf16.mxu0 0
    %61 = vmatpush1.bf16.msra.mxu0 0
    %62 = vmatprep.subr.bf16.mxu0 0
    %63 = vmatpush1.bf16.msra.mxu0 0
    %64 = vmatprep.subr.bf16.mxu0 0
    %65 = vmatpush1.bf16.msra.mxu0 0
    %66 = vmatprep.subr.bf16.mxu0 %v45
    %67 = vmatpush1.bf16.msra.mxu0 %v44
    %68 = vmatprep.subr.bf16.mxu0 %v43
    %69 = vmatpush1.bf16.msra.mxu0 %v42
    %70 = vmatprep.subr.bf16.mxu0 0
    %71 = vmatpush2.bf16.msra.mxu0 0
    %72 = vmatprep.subr.bf16.mxu0 0
    %73 = vmatpush2.bf16.msra.mxu0 0
    %74 = vmatprep.subr.bf16.mxu0 0
    %75 = vmatpush2.bf16.msra.mxu0 0
    %76 = vmatprep.subr.bf16.mxu0 0
    %77 = vmatpush2.bf16.msra.mxu0 0
    %78 = vmatprep.subr.bf16.mxu0 0
    %79 = vmatpush2.bf16.msra.mxu0 0
    %80 = vmatprep.subr.bf16.mxu0 0
    %81 = vmatpush2.bf16.msra.mxu0 0
    %82 = vmatprep.subr.bf16.mxu0 0
    %83 = vmatpush2.bf16.msra.mxu0 0
    %84 = vmatprep.subr.bf16.mxu0 0
    %85 = vmatpush2.bf16.msra.mxu0 0
    %86 = vmatprep.mubr.bf16.mxu0 0
    %87 = vmatmul.mubr.bf16.gmra.mxu0 %v52
    %v88 = vpop.f32.mrf.mxu0
    %v89 = vadd.f32 0.0, %v88
    %v90 = vpop.f32.mrf.mxu0
    %v91 = vadd.f32 0.0, %v90
    %v92 = vpop.f32.mrf.mxu0
    %v93 = vadd.f32 0.0, %v92
    %v94 = vpop.f32.mrf.mxu0
    %v95 = vadd.f32 0.0, %v94
    %96 = vdwg.mxu0
    %v97 = vxor.u32 %v89, 2147483648
    %v98 = vxor.u32 %v93, 2147483648
    %v99 = vmul.f32 %v97, 1.442695
    %v100 = vpow.pop %v99
    %v101 = vmul.f32 %v98, 1.442695
    %v102 = vpow.pop %v101
    %v103 = vadd.f32 %v100, 1.0
    %v104 = vadd.f32 %v102, 1.0
    %v105 = vrcp.pop %v103
    %v106 = vmul.f32 1.0, %v105
    %v107 = vrcp.pop %v104
    %v108 = vmul.f32 1.0, %v107
    %v109 = vmul.f32 %v89, %v106
    %v110 = vmul.f32 %v93, %v108
    %115 = vrot.lane.b32.xlu0 %v89, 32
    %v116 = vpop.permute.xlu0 %115
    %117 = vrot.lane.b32.xlu0 %v91, 32
    %v118 = vpop.permute.xlu0 %117
    %119 = vrot.lane.b32.xlu0 %v93, 32
    %v120 = vpop.permute.xlu0 %119
    %121 = vrot.lane.b32.xlu0 %v95, 32
    %v122 = vpop.permute.xlu0 %121
    %v123 = vsel %vm50, %v116, %v118
    %v124 = vsel %vm50, %v120, %v122
    %v127 = vmul.f32 %v109, %v123
    %v128 = vmul.f32 %v110, %v124
    %v129 = vpack.c.bf16 %v128, %v127
    %v130 = vld [vmem:[#allocation2] sm:$0xff]
    %v131 = vld [vmem:[#allocation2 + $0x8] sm:$0xff]
    %v132 = vld [vmem:[%s2] sm:$0xf]
    %v133 = vld [vmem:[%s2 + $0x4] sm:$0xf]
    %v134 = vld [vmem:[%s2 + $0x8] sm:$0xf]
    %v135 = vld [vmem:[%s2 + $0xc] sm:$0xf]
    %v136 = vld [vmem:[%s2 + $0x10] sm:$0xf]
    %v137 = vld [vmem:[%s2 + $0x14] sm:$0xf]
    %v138 = vld [vmem:[%s2 + $0x18] sm:$0xf]
    %v139 = vld [vmem:[%s2 + $0x1c] sm:$0xf]
    %v140 = vld [vmem:[%s2 + $0x20] sm:$0xf]
    %v141 = vld [vmem:[%s2 + $0x24] sm:$0xf]
    %v142 = vld [vmem:[%s2 + $0x28] sm:$0xf]
    %v143 = vld [vmem:[%s2 + $0x2c] sm:$0xf]
    %v156 = vunpack.c.l.b16 %v132
    %v157 = vunpack.c.l.b16 %v133
    %v158 = vunpack.c.l.b16 %v134
    %v159 = vunpack.c.l.b16 %v135
    %v160 = vunpack.c.l.b16 %v136
    %v161 = vunpack.c.l.b16 %v137
    %v162 = vunpack.c.l.b16 %v138
    %v163 = vunpack.c.l.b16 %v139
    %v164 = vunpack.c.l.b16 %v140
    %v165 = vunpack.c.l.b16 %v141
    %v166 = vunpack.c.l.b16 %v142
    %v167 = vunpack.c.l.b16 %v143
    %v168 = vpack.c.b16 %v157, %v156
    %v169 = vpack.c.b16 %v159, %v158
    %v170 = vpack.c.b16 %v161, %v160
    %v171 = vpack.c.b16 %v163, %v162
    %v172 = vpack.c.b16 %v165, %v164
    %v173 = vpack.c.b16 %v167, %v166
    %vm180 = vcmask 785408
    %v182 = vsel %vm180, %v129, 0
    %184 = vmatprep.subr.bf16.mxu0 0
    %185 = vmatpush1.bf16.msra.mxu0 0
    %186 = vmatprep.subr.bf16.mxu0 0
    %187 = vmatpush1.bf16.msra.mxu0 0
    %188 = vmatprep.subr.bf16.mxu0 0
    %189 = vmatpush1.bf16.msra.mxu0 %v173
    %190 = vmatprep.subr.bf16.mxu0 0
    %191 = vmatpush1.bf16.msra.mxu0 %v172
    %192 = vmatprep.subr.bf16.mxu0 0
    %193 = vmatpush1.bf16.msra.mxu0 %v171
    %194 = vmatprep.subr.bf16.mxu0 0
    %195 = vmatpush1.bf16.msra.mxu0 %v170
    %196 = vmatprep.subr.bf16.mxu0 0
    %197 = vmatpush1.bf16.msra.mxu0 %v169
    %198 = vmatprep.subr.bf16.mxu0 0
    %199 = vmatpush1.bf16.msra.mxu0 %v168
    %200 = vmatprep.subr.bf16.mxu0 0
    %201 = vmatpush2.bf16.msra.mxu0 0
    %202 = vmatprep.subr.bf16.mxu0 0
    %203 = vmatpush2.bf16.msra.mxu0 0
    %204 = vmatprep.subr.bf16.mxu0 0
    %205 = vmatpush2.bf16.msra.mxu0 0
    %206 = vmatprep.subr.bf16.mxu0 0
    %207 = vmatpush2.bf16.msra.mxu0 0
    %208 = vmatprep.subr.bf16.mxu0 0
    %209 = vmatpush2.bf16.msra.mxu0 0
    %210 = vmatprep.subr.bf16.mxu0 0
    %211 = vmatpush2.bf16.msra.mxu0 0
    %212 = vmatprep.subr.bf16.mxu0 0
    %213 = vmatpush2.bf16.msra.mxu0 0
    %214 = vmatprep.subr.bf16.mxu0 0
    %215 = vmatpush2.bf16.msra.mxu0 0
    %216 = vmatprep.mubr.bf16.mxu0 0
    %217 = vmatmul.mubr.bf16.gmra.mxu0 %v182
    %v218 = vpop.f32.mrf.mxu0
    %v219 = vadd.f32 0.0, %v218
    %v220 = vpop.f32.mrf.mxu0
    %v221 = vpop.f32.mrf.mxu0
    %v222 = vadd.f32 0.0, %v221
    %v223 = vpop.f32.mrf.mxu0
    %224 = vdwg.mxu0
    %v225 = vadd.f32 %v130, %v219
    %v226 = vadd.f32 %v131, %v222
    %227 = vst.msk [vmem:[#allocation2] sm:$0xff] %vm50, %v225
    %228 = vst.msk [vmem:[#allocation2 + $0x8] sm:$0xff] %vm50, %v226
    // Predicated region
    $region18: #{_feed_forward_impl.1} parent=1 // pred_check
      %p229 = pneg %p16
    $region19: #{_feed_forward_impl.1} parent=1 // pred_check_branch
      %231 = sbr.rel (%p229) target = $region21
    $region20: #{_feed_forward_impl.1} parent=1 // pred_region
      %v232 = vld [vmem:[#allocation2] sm:$0xff]
      %v233 = vld [vmem:[#allocation2 + $0x8] sm:$0xff]
      %234 = vst.msk [vmem:[#allocation3] sm:$0xff] %vm50, %v232
      %235 = vst.msk [vmem:[#allocation3 + $0x8] sm:$0xff] %vm50, %v233
    $region21: #{_feed_forward_impl.1} parent=1 // pred_fallthru
      _
    // Predicated region
    $region22: #{_feed_forward_impl.1} parent=1 // pred_check
      _
    $region23: #{_feed_forward_impl.1} parent=1 // pred_check_branch
      %237 = sbr.rel (0) target = $region25
    $region24: #{_feed_forward_impl.1} parent=1 // pred_region
      %s239 = ssub.s32 256, 256
      %240 = vsyncadd [#allocation4], %s239
      %s241 = sshll.u32 [#allocation3], 4
      %s242 = int_to_ptr.vmem [resolvable:$true] %s241
      %247 = dma.vmem_to_hbm [thread:$0]  %s242, 256, %s3, [#allocation4], 128, 128, 8
    $region25: #{_feed_forward_impl.1} parent=1 // pred_fallthru
      _
    // Predicated region
    $region26: #{_feed_forward_impl.1} parent=1 // pred_check
      _
    $region27: #{_feed_forward_impl.1} parent=1 // pred_check_branch
      %249 = sbr.rel (0) target = $region29
    $region28: #{_feed_forward_impl.1} parent=1 // pred_region
      %250 = dma.done [#allocation4], 256
    $region29: #{_feed_forward_impl.1} parent=1 // pred_fallthru
      _
    %251 = vsyncpa [#allocation4], 1

</llo_original>
